<compile_context>
chip_gen: v7x
topology: tpu7x:2x2x1
jax: 0.10.0
libtpu: 0.0.40
codegen_flags: <defaults>
</compile_context>

<pallas_src>
import functools

import jax
import jax.numpy as jnp
from jax.experimental import pallas as pl
from jax.experimental.pallas import tpu as pltpu

_LANES = 128
_SUBLANES = 8


def _round_up(x, m):
    return ((x + m - 1) // m) * m


def _hardswish(x):
    # PyTorch nn.Hardswish: x * relu6(x + 3) / 6
    return x * jnp.clip(x + 3.0, 0.0, 6.0) * (1.0 / 6.0)


def _actor_mlp_kernel(x_ref,
                      w1_ref, w2_ref, w3_ref, w4_ref,
                      b_ref,
                      o_ref, *, pm, action_dim):
    """One batch tile of the fused 4-layer MLP.

    Hidden width is zero-padded to pm (multiple of 128); padding is exact since
    padded weight rows/cols and bias lanes are 0 and stay 0 through ReLU/Hardswish.
    Matmuls run in bf16 with f32 accumulation; elementwise math stays f32.
    """
    # Linear(state_dim, mid) + ReLU
    x = x_ref[...].astype(jnp.bfloat16)
    h = jnp.dot(x, w1_ref[...], preferred_element_type=jnp.float32)
    h = jnp.maximum(h + b_ref[0:1, :pm], 0.0)

    # Linear(mid, mid) + ReLU
    h = jnp.dot(h.astype(jnp.bfloat16), w2_ref[...],
                preferred_element_type=jnp.float32)
    h = jnp.maximum(h + b_ref[1:2, :pm], 0.0)

    # Linear(mid, mid) + Hardswish
    h = jnp.dot(h.astype(jnp.bfloat16), w3_ref[...],
                preferred_element_type=jnp.float32)
    h = _hardswish(h + b_ref[2:3, :pm])

    # Linear(mid, action_dim): full padded width on the MXU, but store only the
    # real action_dim lanes (small HBM write instead of 16x-amplified padded one).
    h = jnp.dot(h.astype(jnp.bfloat16), w4_ref[...],
                preferred_element_type=jnp.float32)
    logits = h[:, :action_dim] + b_ref[3:4, :action_dim]
    o_ref[...] = logits.astype(o_ref.dtype)


def prepare_params(params):
    """One-time parameter prep (call once per parameter update, NOT per step).

    Pads hidden/output widths to 128 lanes, casts weights to bf16 (native MXU
    format), and packs the four bias vectors into one f32 (4, pbias) buffer.
    """
    state_dim, mid_dim = params["w1"].shape
    action_dim = params["w4"].shape[1]
    pm = _round_up(mid_dim, _LANES)       # padded hidden width
    pa = _round_up(action_dim, _LANES)    # padded width for the last matmul
    pbias = max(pm, pa)

    w1 = jnp.pad(params["w1"], ((0, 0), (0, pm - mid_dim))).astype(jnp.bfloat16)
    w2 = jnp.pad(params["w2"], ((0, pm - mid_dim), (0, pm - mid_dim))).astype(jnp.bfloat16)
    w3 = jnp.pad(params["w3"], ((0, pm - mid_dim), (0, pm - mid_dim))).astype(jnp.bfloat16)
    w4 = jnp.pad(params["w4"], ((0, pm - mid_dim), (0, pa - action_dim))).astype(jnp.bfloat16)
    b = jnp.stack([
        jnp.pad(params["b1"][0], (0, pbias - mid_dim)),
        jnp.pad(params["b2"][0], (0, pbias - mid_dim)),
        jnp.pad(params["b3"][0], (0, pbias - mid_dim)),
        jnp.pad(params["b4"][0], (0, pbias - action_dim)),
    ]).astype(jnp.float32)                # (4, pbias): one DMA instead of four

    return {"w1": w1, "w2": w2, "w3": w3, "w4": w4, "b": b,
            "dims": (state_dim, mid_dim, action_dim, pm, pa, pbias)}


def actor_discrete_ppo_forward(state, prepped, *, block_batch=1024):
    """Forward pass of ActorDiscretePPO.net as a single Pallas kernel.

    state:   [batch, state_dim] f32
    prepped: output of prepare_params(params)
    returns: [batch, action_dim] f32 pre-softmax logits (same semantics as
             the PyTorch module's forward()).
    """
    batch, state_dim = state.shape
    sd, mid_dim, action_dim, pm, pa, pbias = prepped["dims"]
    assert state_dim == sd, "state_dim mismatch with prepared params"
    w1, w2, w3, w4, b = (prepped[k] for k in ("w1", "w2", "w3", "w4", "b"))

    # ---- batch tiling ----
    # Aim for >=4 grid steps on large batches (>=2 pipelined steps per TC on
    # v7x's two TensorCores) but never shrink the tile below 256 rows, so
    # v5e/v6e still amortize the ~0.35us per-step overhead.
    pb8 = _round_up(batch, _SUBLANES)
    tb = min(block_batch, pb8)
    if pb8 >= 4 * 256:
        tb = min(tb, max(256, _round_up(pl.cdiv(pb8, 4), _SUBLANES)))
    pb = _round_up(pb8, tb)
    # Note: don't pad K=state_dim; padding the contraction dim only adds MXU
    # passes and DMA bytes for zero gain.
    x = state if pb == batch else jnp.pad(state, ((0, pb - batch), (0, 0)))
    grid = (pb // tb,)

    # ---- VMEM budget: real footprint + headroom, capped below v7x's 64 MiB ----
    weight_bytes = 2 * (w1.size + w2.size + w3.size + w4.size)   # bf16, 1 buffer
    bias_bytes = 4 * b.size                                      # f32, 1 buffer
    io_tile_bytes = 2 * 4 * (tb * state_dim + tb * action_dim)   # in/out, 2 buffers
    act_bytes = 2 * 4 * tb * pm                                  # f32 activation slabs
    footprint = weight_bytes + bias_bytes + io_tile_bytes + act_bytes
    vmem_limit = int(min(2 * footprint + (4 << 20), 48 << 20))

    # ---- advisory cost estimate for XLA's scheduler ----
    flops = 2 * pb * (state_dim * pm + 2 * pm * pm + pm * pa)
    bytes_accessed = x.size * 4 + weight_bytes + bias_bytes + pb * action_dim * 4
    cost = pl.CostEstimate(flops=flops, transcendentals=0,
                           bytes_accessed=bytes_accessed)

    kernel = functools.partial(_actor_mlp_kernel, pm=pm, action_dim=action_dim)
    resident = {"pipeline_mode": pl.Buffered(1)}   # constant index_map -> 1 buffer

    out = pl.pallas_call(
        kernel,
        out_shape=jax.ShapeDtypeStruct((pb, action_dim), jnp.float32),
        grid=grid,
        in_specs=[
            pl.BlockSpec((tb, state_dim), lambda i: (i, 0)),              # batch tile
            pl.BlockSpec((state_dim, pm), lambda i: (0, 0), **resident),  # VMEM-resident
            pl.BlockSpec((pm, pm),        lambda i: (0, 0), **resident),  # weights
            pl.BlockSpec((pm, pm),        lambda i: (0, 0), **resident),
            pl.BlockSpec((pm, pa),        lambda i: (0, 0), **resident),
            pl.BlockSpec((4, pbias),      lambda i: (0, 0), **resident),  # packed biases
        ],
        out_specs=pl.BlockSpec((tb, action_dim), lambda i: (i, 0)),       # narrow store
        compiler_params=pltpu.CompilerParams(
            dimension_semantics=("parallel",),        # independent rows
            vmem_limit_bytes=vmem_limit),
        cost_estimate=cost,
    )(x, w1, w2, w3, w4, b)

    return out if pb == batch else out[:batch]


def init_params(key, state_dim, mid_dim, action_dim):
    """Deterministic parameter init (synthetic, PyTorch-Linear-style uniform)."""
    keys = jax.random.split(key, 8)
    dims = [(state_dim, mid_dim), (mid_dim, mid_dim),
            (mid_dim, mid_dim), (mid_dim, action_dim)]
    params = {}
    for i, (din, dout) in enumerate(dims, start=1):
        scale = 1.0 / jnp.sqrt(jnp.float32(din))
        params[f"w{i}"] = jax.random.uniform(
            keys[2 * (i - 1)], (din, dout), jnp.float32, -scale, scale)
        params[f"b{i}"] = jax.random.uniform(
            keys[2 * (i - 1) + 1], (1, dout), jnp.float32, -scale, scale)
    return params


def reference_forward(state, params):
    h = jnp.maximum(state @ params["w1"] + params["b1"], 0.0)
    h = jnp.maximum(h @ params["w2"] + params["b2"], 0.0)
    h = h @ params["w3"] + params["b3"]
    h = _hardswish(h)
    return h @ params["w4"] + params["b4"]


if __name__ == "__main__":
    batch, state_dim, mid_dim, action_dim = 8, 16, 32, 8

    key = jax.random.PRNGKey(0)
    k_state, k_params, k_big = jax.random.split(key, 3)

    state = jax.random.normal(k_state, (batch, state_dim), jnp.float32)
    params = init_params(k_params, state_dim, mid_dim, action_dim)
    prepped = prepare_params(params)   # hoisted off the per-call hot path

    # Small-shape run (single grid step).
    logits = jax.block_until_ready(actor_discrete_ppo_forward(state, prepped))
    ref = reference_forward(state, params)
    assert logits.shape == (batch, action_dim)
    # bf16 matmul operands -> looser tolerance vs the f32 reference.
    assert jnp.allclose(logits, ref, atol=5e-2, rtol=5e-2), \
        float(jnp.max(jnp.abs(logits - ref)))

    # Rollout-sized run exercising the multi-grid-step path (grid = (4,)).
    big_batch = 2048
    big_state = jax.random.normal(k_big, (big_batch, state_dim), jnp.float32)
    big_logits = jax.block_until_ready(
        actor_discrete_ppo_forward(big_state, prepped))
    big_ref = reference_forward(big_state, params)
    assert big_logits.shape == (big_batch, action_dim)
    assert jnp.allclose(big_logits, big_ref, atol=5e-2, rtol=5e-2), \
        float(jnp.max(jnp.abs(big_logits - big_ref)))

    print("KERNEL_OK")
</pallas_src>

<mosaic_0001>
module attributes {stable_mosaic.version = 11 : i64} {
  func.func @_actor_mlp_kernel(%arg0: i32, %arg1: memref<8x16xf32, #tpu.memory_space<vmem>>, %arg2: memref<16x128xbf16, #tpu.memory_space<vmem>>, %arg3: memref<128x128xbf16, #tpu.memory_space<vmem>>, %arg4: memref<128x128xbf16, #tpu.memory_space<vmem>>, %arg5: memref<128x128xbf16, #tpu.memory_space<vmem>>, %arg6: memref<4x128xf32, #tpu.memory_space<vmem>>, %arg7: memref<8x8xf32, #tpu.memory_space<vmem>>) attributes {dimension_semantics = [#tpu.dimension_semantics<parallel>], iteration_bounds = array<i64: 1>, scalar_prefetch = 0 : i64, scratch_operands = 0 : i64, tpu.core_type = #tpu.core_type<tc>, window_params = [{transform_indices = @transform_0, window_bounds = array<i64: 8, 16>}, {pipeline_mode = #tpu.pipeline_mode<synchronous>, transform_indices = @transform_1, window_bounds = array<i64: 16, 128>}, {pipeline_mode = #tpu.pipeline_mode<synchronous>, transform_indices = @transform_2, window_bounds = array<i64: 128, 128>}, {pipeline_mode = #tpu.pipeline_mode<synchronous>, transform_indices = @transform_3, window_bounds = array<i64: 128, 128>}, {pipeline_mode = #tpu.pipeline_mode<synchronous>, transform_indices = @transform_4, window_bounds = array<i64: 128, 128>}, {pipeline_mode = #tpu.pipeline_mode<synchronous>, transform_indices = @transform_5, window_bounds = array<i64: 4, 128>}, {transform_indices = @transform_6, window_bounds = array<i64: 8, 8>}]} {
    %c0 = arith.constant 0 : index
    %c0_0 = arith.constant 0 : index
    %0 = vector.load %arg1[%c0, %c0_0] : memref<8x16xf32, #tpu.memory_space<vmem>>, vector<8x16xf32>
    %1 = arith.truncf %0 : vector<8x16xf32> to vector<8x16xbf16>
    %c0_1 = arith.constant 0 : index
    %c0_2 = arith.constant 0 : index
    %2 = vector.load %arg2[%c0_1, %c0_2] : memref<16x128xbf16, #tpu.memory_space<vmem>>, vector<16x128xbf16>
    %cst = arith.constant dense<0.000000e+00> : vector<8x128xf32>
    %3 = tpu.matmul %1, %2, %cst {dimension_numbers = #tpu.dot_dimension_numbers<[1], [0], [0], [1], [0, 0, 1, 1], [], []>} : vector<8x16xbf16>, vector<16x128xbf16>, vector<8x128xf32> -> vector<8x128xf32>
    %c0_3 = arith.constant 0 : index
    %c0_4 = arith.constant 0 : index
    %4 = vector.load %arg6[%c0_3, %c0_4] : memref<4x128xf32, #tpu.memory_space<vmem>>, vector<1x128xf32>
    %5 = vector.broadcast %4 : vector<1x128xf32> to vector<8x128xf32>
    %6 = arith.addf %3, %5 : vector<8x128xf32>
    %cst_5 = arith.constant 0.000000e+00 : f32
    %7 = vector.broadcast %cst_5 : f32 to vector<8x128xf32>
    %8 = arith.maximumf %6, %7 : vector<8x128xf32>
    %9 = arith.truncf %8 : vector<8x128xf32> to vector<8x128xbf16>
    %c0_6 = arith.constant 0 : index
    %c0_7 = arith.constant 0 : index
    %10 = vector.load %arg3[%c0_6, %c0_7] : memref<128x128xbf16, #tpu.memory_space<vmem>>, vector<128x128xbf16>
    %cst_8 = arith.constant dense<0.000000e+00> : vector<8x128xf32>
    %11 = tpu.matmul %9, %10, %cst_8 {dimension_numbers = #tpu.dot_dimension_numbers<[1], [0], [0], [1], [0, 0, 1, 1], [], []>} : vector<8x128xbf16>, vector<128x128xbf16>, vector<8x128xf32> -> vector<8x128xf32>
    %c1 = arith.constant 1 : index
    %c0_9 = arith.constant 0 : index
    %12 = vector.load %arg6[%c1, %c0_9] : memref<4x128xf32, #tpu.memory_space<vmem>>, vector<1x128xf32>
    %13 = vector.broadcast %12 : vector<1x128xf32> to vector<8x128xf32>
    %14 = arith.addf %11, %13 : vector<8x128xf32>
    %cst_10 = arith.constant 0.000000e+00 : f32
    %15 = vector.broadcast %cst_10 : f32 to vector<8x128xf32>
    %16 = arith.maximumf %14, %15 : vector<8x128xf32>
    %17 = arith.truncf %16 : vector<8x128xf32> to vector<8x128xbf16>
    %c0_11 = arith.constant 0 : index
    %c0_12 = arith.constant 0 : index
    %18 = vector.load %arg4[%c0_11, %c0_12] : memref<128x128xbf16, #tpu.memory_space<vmem>>, vector<128x128xbf16>
    %cst_13 = arith.constant dense<0.000000e+00> : vector<8x128xf32>
    %19 = tpu.matmul %17, %18, %cst_13 {dimension_numbers = #tpu.dot_dimension_numbers<[1], [0], [0], [1], [0, 0, 1, 1], [], []>} : vector<8x128xbf16>, vector<128x128xbf16>, vector<8x128xf32> -> vector<8x128xf32>
    %c2 = arith.constant 2 : index
    %c0_14 = arith.constant 0 : index
    %20 = vector.load %arg6[%c2, %c0_14] : memref<4x128xf32, #tpu.memory_space<vmem>>, vector<1x128xf32>
    %21 = vector.broadcast %20 : vector<1x128xf32> to vector<8x128xf32>
    %22 = arith.addf %19, %21 : vector<8x128xf32>
    %cst_15 = arith.constant 3.000000e+00 : f32
    %23 = vector.broadcast %cst_15 : f32 to vector<8x128xf32>
    %24 = arith.addf %22, %23 : vector<8x128xf32>
    %cst_16 = arith.constant 0.000000e+00 : f32
    %cst_17 = arith.constant 6.000000e+00 : f32
    %25 = vector.broadcast %cst_16 : f32 to vector<8x128xf32>
    %26 = arith.maximumf %25, %24 : vector<8x128xf32>
    %27 = vector.broadcast %cst_17 : f32 to vector<8x128xf32>
    %28 = arith.minimumf %27, %26 : vector<8x128xf32>
    %29 = arith.mulf %22, %28 : vector<8x128xf32>
    %cst_18 = arith.constant 0.166666672 : f32
    %30 = vector.broadcast %cst_18 : f32 to vector<8x128xf32>
    %31 = arith.mulf %29, %30 : vector<8x128xf32>
    %32 = arith.truncf %31 : vector<8x128xf32> to vector<8x128xbf16>
    %c0_19 = arith.constant 0 : index
    %c0_20 = arith.constant 0 : index
    %33 = vector.load %arg5[%c0_19, %c0_20] : memref<128x128xbf16, #tpu.memory_space<vmem>>, vector<128x128xbf16>
    %cst_21 = arith.constant dense<0.000000e+00> : vector<8x128xf32>
    %34 = tpu.matmul %32, %33, %cst_21 {dimension_numbers = #tpu.dot_dimension_numbers<[1], [0], [0], [1], [0, 0, 1, 1], [], []>} : vector<8x128xbf16>, vector<128x128xbf16>, vector<8x128xf32> -> vector<8x128xf32>
    %35 = vector.extract_strided_slice %34 {offsets = [0, 0], sizes = [8, 8], strides = [1, 1]} : vector<8x128xf32> to vector<8x8xf32>
    %c3 = arith.constant 3 : index
    %c0_22 = arith.constant 0 : index
    %36 = vector.load %arg6[%c3, %c0_22] : memref<4x128xf32, #tpu.memory_space<vmem>>, vector<1x8xf32>
    %37 = vector.broadcast %36 : vector<1x8xf32> to vector<8x8xf32>
    %38 = arith.addf %35, %37 : vector<8x8xf32>
    %c0_23 = arith.constant 0 : index
    %c0_24 = arith.constant 0 : index
    %39 = vector.load %arg7[%c0_23, %c0_24] : memref<8x8xf32, #tpu.memory_space<vmem>>, vector<8x8xf32>
    tpu.vector_store %arg7[%c0_23, %c0_24], %38 {strides = array<i32>} : memref<8x8xf32, #tpu.memory_space<vmem>>, vector<8x8xf32>,
    return
  }
  func.func @transform_0(%arg0: i32) -> (i32, i32) {
    %c0_i32 = arith.constant 0 : i32
    %c0_i32_0 = arith.constant 0 : i32
    return %arg0, %c0_i32 : i32, i32
  }
  func.func @transform_1(%arg0: i32) -> (i32, i32) {
    %c0_i32 = arith.constant 0 : i32
    %c0_i32_0 = arith.constant 0 : i32
    %c0_i32_1 = arith.constant 0 : i32
    return %c0_i32, %c0_i32_0 : i32, i32
  }
  func.func @transform_2(%arg0: i32) -> (i32, i32) {
    %c0_i32 = arith.constant 0 : i32
    %c0_i32_0 = arith.constant 0 : i32
    %c0_i32_1 = arith.constant 0 : i32
    return %c0_i32, %c0_i32_0 : i32, i32
  }
  func.func @transform_3(%arg0: i32) -> (i32, i32) {
    %c0_i32 = arith.constant 0 : i32
    %c0_i32_0 = arith.constant 0 : i32
    %c0_i32_1 = arith.constant 0 : i32
    return %c0_i32, %c0_i32_0 : i32, i32
  }
  func.func @transform_4(%arg0: i32) -> (i32, i32) {
    %c0_i32 = arith.constant 0 : i32
    %c0_i32_0 = arith.constant 0 : i32
    %c0_i32_1 = arith.constant 0 : i32
    return %c0_i32, %c0_i32_0 : i32, i32
  }
  func.func @transform_5(%arg0: i32) -> (i32, i32) {
    %c0_i32 = arith.constant 0 : i32
    %c0_i32_0 = arith.constant 0 : i32
    %c0_i32_1 = arith.constant 0 : i32
    return %c0_i32, %c0_i32_0 : i32, i32
  }
  func.func @transform_6(%arg0: i32) -> (i32, i32) {
    %c0_i32 = arith.constant 0 : i32
    %c0_i32_0 = arith.constant 0 : i32
    return %arg0, %c0_i32 : i32, i32
  }
}

</mosaic_0001>

<llo_original>
// kernel: tpu_custom_call.1
$region0: #{tpu_custom_call.1}
  #allocation0 [shape = 'u32[]', space=smem, size = 0x4, offset = 0x4, fixed_abs, tag = 'smem constant byte address 0x4 - core index']
  #allocation1 [shape = 'u32[144,128]{1,0:T(1,128)}', space=vmem, size = 0x12000, scoped, tag = 'internal scratch']
  %s0 = inlined_call_operand.hbm [shape: f32[8,16], index: 0, kind: input, shape index: {}]
  %s1 = inlined_call_operand.hbm [shape: bf16[16,128], index: 1, kind: input, shape index: {}]
  %s2 = inlined_call_operand.hbm [shape: bf16[128,128], index: 2, kind: input, shape index: {}]
  %s3 = inlined_call_operand.hbm [shape: bf16[128,128], index: 3, kind: input, shape index: {}]
  %s4 = inlined_call_operand.hbm [shape: bf16[128,128], index: 4, kind: input, shape index: {}]
  %s5 = inlined_call_operand.vmem [shape: f32[4,128], index: 5, kind: input, shape index: {}]
  %s6 = inlined_call_operand.hbm [shape: f32[8,8], index: 6, kind: output, shape index: {}]
  %s7 = sld [smem:[#allocation0]]
  $region54: #{tpu_custom_call.1} parent=0
    _
  %s9 = ssub.s32 1, %s7
  %s10 = scalar_select 0, %s9, %s7
  $region1: #{tpu_custom_call.1} parent=0
    #allocation2 [shape = 'u8[4096]{0}', space=vmem, size = 0x1000, scoped, tag = 'input window, operand 0, single buffered']
    #allocation3 [shape = 's32[1]{0}', space=sflag, size = 0x4, scoped, tag = 'scoped memory for tpu_custom_call.1']
    #allocation4 [shape = 's32[1]{0}', space=sflag, size = 0x4, scoped, tag = 'scoped memory for tpu_custom_call.1']
    #allocation5 [shape = 'u8[4096]{0}', space=vmem, size = 0x1000, scoped, tag = 'input window, operand 1, single buffered']
    #allocation6 [shape = 's32[1]{0}', space=sflag, size = 0x4, scoped, tag = 'scoped memory for tpu_custom_call.1']
    #allocation7 [shape = 'u8[32768]{0}', space=vmem, size = 0x8000, scoped, tag = 'input window, operand 2, single buffered']
    #allocation8 [shape = 'u8[32768]{0}', space=vmem, size = 0x8000, scoped, tag = 'input window, operand 3, single buffered']
    #allocation9 [shape = 's32[1]{0}', space=sflag, size = 0x4, scoped, tag = 'scoped memory for tpu_custom_call.1']
    #allocation10 [shape = 'u8[32768]{0}', space=vmem, size = 0x8000, scoped, tag = 'input window, operand 4, single buffered']
    #allocation11 [shape = 'u8[4096]{0}', space=vmem, size = 0x1000, scoped, tag = 'output window, operand 0, single buffered']
    %11 = vsyncpa [#allocation3], 0
    %12 = vsyncpa [#allocation6], 0
    %13 = vsyncpa [#allocation9], 0
    %14 = vsyncpa [#allocation4], 0
    // Predicated region
    $region2: #{tpu_custom_call.1} parent=1 // pred_check
      _
    $region3: #{tpu_custom_call.1} parent=1 // pred_check_branch
      %16 = sbr.rel (0) target = $region5
    $region4: #{tpu_custom_call.1} parent=1 // pred_region
      %s18 = ssub.s32 128, 128
      %19 = vsyncadd [#allocation3], %s18
      %s21 = sshll.u32 [#allocation2], 4
      %s22 = int_to_ptr.vmem [resolvable:$true] %s21
      %24 = dma.hbm_to_vmem [thread:$0]  %s0, 128, %s22, [#allocation3]
    $region5: #{tpu_custom_call.1} parent=1 // pred_fallthru
      _
    // Predicated region
    $region6: #{tpu_custom_call.1} parent=1 // pred_check
      _
    $region7: #{tpu_custom_call.1} parent=1 // pred_check_branch
      %26 = sbr.rel (0) target = $region9
    $region8: #{tpu_custom_call.1} parent=1 // pred_region
      %s28 = ssub.s32 128, 128
      %29 = vsyncadd [#allocation6], %s28
      %s30 = sshll.u32 [#allocation5], 4
      %s31 = int_to_ptr.vmem [resolvable:$true] %s30
      %36 = dma.hbm_to_vmem [thread:$0]  %s1, 128, %s31, [#allocation6], 64, 64, 4
    $region9: #{tpu_custom_call.1} parent=1 // pred_fallthru
      _
    // Predicated region
    $region10: #{tpu_custom_call.1} parent=1 // pred_check
      _
    $region11: #{tpu_custom_call.1} parent=1 // pred_check_branch
      %38 = sbr.rel (0) target = $region13
    $region12: #{tpu_custom_call.1} parent=1 // pred_region
      %s40 = ssub.s32 1024, 1024
      %41 = vsyncadd [#allocation6], %s40
      %s42 = sshll.u32 [#allocation7], 4
      %s43 = int_to_ptr.vmem [resolvable:$true] %s42
      %48 = dma.hbm_to_vmem [thread:$0]  %s2, 1024, %s43, [#allocation6], 64, 64, 4
    $region13: #{tpu_custom_call.1} parent=1 // pred_fallthru
      _
    // Predicated region
    $region14: #{tpu_custom_call.1} parent=1 // pred_check
      _
    $region15: #{tpu_custom_call.1} parent=1 // pred_check_branch
      %50 = sbr.rel (0) target = $region17
    $region16: #{tpu_custom_call.1} parent=1 // pred_region
      %s52 = ssub.s32 1024, 1024
      %53 = vsyncadd [#allocation9], %s52
      %s54 = sshll.u32 [#allocation8], 4
      %s55 = int_to_ptr.vmem [resolvable:$true] %s54
      %60 = dma.hbm_to_vmem [thread:$0]  %s3, 1024, %s55, [#allocation9], 64, 64, 4
    $region17: #{tpu_custom_call.1} parent=1 // pred_fallthru
      _
    // Predicated region
    $region18: #{tpu_custom_call.1} parent=1 // pred_check
      _
    $region19: #{tpu_custom_call.1} parent=1 // pred_check_branch
      %62 = sbr.rel (0) target = $region21
    $region20: #{tpu_custom_call.1} parent=1 // pred_region
      %s64 = ssub.s32 1024, 1024
      %65 = vsyncadd [#allocation9], %s64
      %s66 = sshll.u32 [#allocation10], 4
      %s67 = int_to_ptr.vmem [resolvable:$true] %s66
      %72 = dma.hbm_to_vmem [thread:$0]  %s4, 1024, %s67, [#allocation9], 64, 64, 4
    $region21: #{tpu_custom_call.1} parent=1 // pred_fallthru
      _
    // Predicated region
    $region22: #{tpu_custom_call.1} parent=1 // pred_check
      _
    $region23: #{tpu_custom_call.1} parent=1 // pred_check_branch
      %74 = sbr.rel (0) target = $region25
    $region24: #{tpu_custom_call.1} parent=1 // pred_region
      _
    $region25: #{tpu_custom_call.1} parent=1 // pred_fallthru
      _
    // Predicated region
    $region26: #{tpu_custom_call.1} parent=1 // pred_check
      _
    $region27: #{tpu_custom_call.1} parent=1 // pred_check_branch
      %76 = sbr.rel (0) target = $region29
    $region28: #{tpu_custom_call.1} parent=1 // pred_region
      %77 = dma.done [#allocation3], 128
    $region29: #{tpu_custom_call.1} parent=1 // pred_fallthru
      _
    // Predicated region
    $region30: #{tpu_custom_call.1} parent=1 // pred_check
      _
    $region31: #{tpu_custom_call.1} parent=1 // pred_check_branch
      %79 = sbr.rel (0) target = $region33
    $region32: #{tpu_custom_call.1} parent=1 // pred_region
      %80 = dma.done [#allocation6], 128
    $region33: #{tpu_custom_call.1} parent=1 // pred_fallthru
      _
    // Predicated region
    $region34: #{tpu_custom_call.1} parent=1 // pred_check
      _
    $region35: #{tpu_custom_call.1} parent=1 // pred_check_branch
      %82 = sbr.rel (0) target = $region37
    $region36: #{tpu_custom_call.1} parent=1 // pred_region
      %83 = dma.done [#allocation6], 1024
    $region37: #{tpu_custom_call.1} parent=1 // pred_fallthru
      _
    // Predicated region
    $region38: #{tpu_custom_call.1} parent=1 // pred_check
      _
    $region39: #{tpu_custom_call.1} parent=1 // pred_check_branch
      %85 = sbr.rel (0) target = $region41
    $region40: #{tpu_custom_call.1} parent=1 // pred_region
      %86 = dma.done [#allocation9], 1024
    $region41: #{tpu_custom_call.1} parent=1 // pred_fallthru
      _
    // Predicated region
    $region42: #{tpu_custom_call.1} parent=1 // pred_check
      _
    $region43: #{tpu_custom_call.1} parent=1 // pred_check_branch
      %88 = sbr.rel (0) target = $region45
    $region44: #{tpu_custom_call.1} parent=1 // pred_region
      %89 = dma.done [#allocation9], 1024
    $region45: #{tpu_custom_call.1} parent=1 // pred_fallthru
      _
    %v91 = vld [vmem:[#allocation2] sm:$0xff]
    %v92 = vpack.c.bf16 %v91, %v91
    %v93 = vld [vmem:[#allocation5] sm:$0xf]
    %v94 = vld [vmem:[#allocation5 + $0x4] sm:$0xf]
    %v95 = vld [vmem:[%s5] sm:$0x1]
    %v96 = vlaneseq
    %v97 = vshrl.u32 %v96, 7
    %v98 = vsub.s32 0, %v97
    %v99 = vrot.slane %v95, %v98
    %v102 = vunpack.c.l.b16 %v93
    %v103 = vunpack.c.l.b16 %v94
    %v104 = vpack.c.b16 %v103, %v102
    %vm106 = vcmask 130048
    %v108 = vsel %vm106, %v92, 0
    %110 = vmatprep.subr.bf16.mxu0 0
    %111 = vmatpush1.bf16.msra.mxu0 %v104
    %112 = vmatprep.subr.bf16.mxu0 0
    %113 = vmatpush1.bf16.msra.mxu0 0
    %114 = vmatprep.subr.bf16.mxu0 0
    %115 = vmatpush1.bf16.msra.mxu0 0
    %116 = vmatprep.subr.bf16.mxu0 0
    %117 = vmatpush1.bf16.msra.mxu0 0
    %118 = vmatprep.subr.bf16.mxu0 0
    %119 = vmatpush1.bf16.msra.mxu0 0
    %120 = vmatprep.subr.bf16.mxu0 0
    %121 = vmatpush1.bf16.msra.mxu0 0
    %122 = vmatprep.subr.bf16.mxu0 0
    %123 = vmatpush1.bf16.msra.mxu0 0
    %124 = vmatprep.subr.bf16.mxu0 0
    %125 = vmatpush1.bf16.msra.mxu0 0
    %126 = vmatprep.subr.bf16.mxu0 0
    %127 = vmatpush1.bf16.msra.mxu0 0
    %128 = vmatprep.subr.bf16.mxu0 0
    %129 = vmatpush1.bf16.msra.mxu0 0
    %130 = vmatprep.subr.bf16.mxu0 0
    %131 = vmatpush1.bf16.msra.mxu0 0
    %132 = vmatprep.subr.bf16.mxu0 0
    %133 = vmatpush1.bf16.msra.mxu0 0
    %134 = vmatprep.subr.bf16.mxu0 0
    %135 = vmatpush1.bf16.msra.mxu0 0
    %136 = vmatprep.subr.bf16.mxu0 0
    %137 = vmatpush1.bf16.msra.mxu0 0
    %138 = vmatprep.subr.bf16.mxu0 0
    %139 = vmatpush1.bf16.msra.mxu0 0
    %140 = vmatprep.subr.bf16.mxu0 0
    %141 = vmatpush1.bf16.msra.mxu0 0
    %142 = vmatprep.mubr.bf16.mxu0 0
    %143 = vmatmul.mubr.bf16.gmra.mrb[0].mxu0 %v108
    %v144 = vpop.f32.mrb[0].mxu0
    %v145 = vadd.f32 %v99, %v144
    %v146 = vpop.f32.mrb[0].mxu0
    %v147 = vpop.f32.mrb[0].mxu0
    %v148 = vpop.f32.mrb[0].mxu0
    %149 = vdwg.mxu0
    %v150 = vmax.f32 %v145, 0.0
    %v151 = vpack.c.bf16 %v150, %v150
    %v152 = vld [vmem:[#allocation7] sm:$0xf]
    %v153 = vld [vmem:[#allocation7 + $0x4] sm:$0xf]
    %v154 = vld [vmem:[#allocation7 + $0x8] sm:$0xf]
    %v155 = vld [vmem:[#allocation7 + $0xc] sm:$0xf]
    %v156 = vld [vmem:[#allocation7 + $0x10] sm:$0xf]
    %v157 = vld [vmem:[#allocation7 + $0x14] sm:$0xf]
    %v158 = vld [vmem:[#allocation7 + $0x18] sm:$0xf]
    %v159 = vld [vmem:[#allocation7 + $0x1c] sm:$0xf]
    %v160 = vld [vmem:[#allocation7 + $0x20] sm:$0xf]
    %v161 = vld [vmem:[#allocation7 + $0x24] sm:$0xf]
    %v162 = vld [vmem:[#allocation7 + $0x28] sm:$0xf]
    %v163 = vld [vmem:[#allocation7 + $0x2c] sm:$0xf]
    %v164 = vld [vmem:[#allocation7 + $0x30] sm:$0xf]
    %v165 = vld [vmem:[#allocation7 + $0x34] sm:$0xf]
    %v166 = vld [vmem:[#allocation7 + $0x38] sm:$0xf]
    %v167 = vld [vmem:[#allocation7 + $0x3c] sm:$0xf]
    %v168 = vld [vmem:[%s5 + $0x1] sm:$0x1]
    %v169 = vlaneseq
    %v170 = vshrl.u32 %v169, 7
    %v171 = vsub.s32 0, %v170
    %v172 = vrot.slane %v168, %v171
    %v189 = vunpack.c.l.b16 %v152
    %v190 = vunpack.c.l.b16 %v153
    %v191 = vunpack.c.l.b16 %v154
    %v192 = vunpack.c.l.b16 %v155
    %v193 = vunpack.c.l.b16 %v156
    %v194 = vunpack.c.l.b16 %v157
    %v195 = vunpack.c.l.b16 %v158
    %v196 = vunpack.c.l.b16 %v159
    %v197 = vunpack.c.l.b16 %v160
    %v198 = vunpack.c.l.b16 %v161
    %v199 = vunpack.c.l.b16 %v162
    %v200 = vunpack.c.l.b16 %v163
    %v201 = vunpack.c.l.b16 %v164
    %v202 = vunpack.c.l.b16 %v165
    %v203 = vunpack.c.l.b16 %v166
    %v204 = vunpack.c.l.b16 %v167
    %v205 = vpack.c.b16 %v190, %v189
    %v206 = vpack.c.b16 %v192, %v191
    %v207 = vpack.c.b16 %v194, %v193
    %v208 = vpack.c.b16 %v196, %v195
    %v209 = vpack.c.b16 %v198, %v197
    %v210 = vpack.c.b16 %v200, %v199
    %v211 = vpack.c.b16 %v202, %v201
    %v212 = vpack.c.b16 %v204, %v203
    %221 = vmatprep.subr.bf16.mxu0 0
    %222 = vmatpush1.bf16.msra.mxu0 %v205
    %223 = vmatprep.subr.bf16.mxu0 0
    %224 = vmatpush1.bf16.msra.mxu0 %v206
    %225 = vmatprep.subr.bf16.mxu0 0
    %226 = vmatpush1.bf16.msra.mxu0 %v207
    %227 = vmatprep.subr.bf16.mxu0 0
    %228 = vmatpush1.bf16.msra.mxu0 %v208
    %229 = vmatprep.subr.bf16.mxu0 0
    %230 = vmatpush1.bf16.msra.mxu0 %v209
    %231 = vmatprep.subr.bf16.mxu0 0
    %232 = vmatpush1.bf16.msra.mxu0 %v210
    %233 = vmatprep.subr.bf16.mxu0 0
    %234 = vmatpush1.bf16.msra.mxu0 %v211
    %235 = vmatprep.subr.bf16.mxu0 0
    %236 = vmatpush1.bf16.msra.mxu0 %v212
    %237 = vmatprep.subr.bf16.mxu0 0
    %238 = vmatpush1.bf16.msra.mxu0 0
    %239 = vmatprep.subr.bf16.mxu0 0
    %240 = vmatpush1.bf16.msra.mxu0 0
    %241 = vmatprep.subr.bf16.mxu0 0
    %242 = vmatpush1.bf16.msra.mxu0 0
    %243 = vmatprep.subr.bf16.mxu0 0
    %244 = vmatpush1.bf16.msra.mxu0 0
    %245 = vmatprep.subr.bf16.mxu0 0
    %246 = vmatpush1.bf16.msra.mxu0 0
    %247 = vmatprep.subr.bf16.mxu0 0
    %248 = vmatpush1.bf16.msra.mxu0 0
    %249 = vmatprep.subr.bf16.mxu0 0
    %250 = vmatpush1.bf16.msra.mxu0 0
    %251 = vmatprep.subr.bf16.mxu0 0
    %252 = vmatpush1.bf16.msra.mxu0 0
    %253 = vmatprep.mubr.bf16.mxu0 0
    %254 = vmatmul.mubr.bf16.gmra.mrb[0].mxu0 %v151
    %v255 = vpop.f32.mrb[0].mxu0
    %v256 = vadd.f32 %v172, %v255
    %v257 = vpop.f32.mrb[0].mxu0
    %v258 = vpop.f32.mrb[0].mxu0
    %v259 = vpop.f32.mrb[0].mxu0
    %260 = vdwg.mxu0
    %v261 = vmax.f32 %v256, 0.0
    %v262 = vpack.c.bf16 %v261, %v261
    %v263 = vld [vmem:[#allocation8] sm:$0xf]
    %v264 = vld [vmem:[#allocation8 + $0x4] sm:$0xf]
    %v265 = vld [vmem:[#allocation8 + $0x8] sm:$0xf]
    %v266 = vld [vmem:[#allocation8 + $0xc] sm:$0xf]
    %v267 = vld [vmem:[#allocation8 + $0x10] sm:$0xf]
    %v268 = vld [vmem:[#allocation8 + $0x14] sm:$0xf]
    %v269 = vld [vmem:[#allocation8 + $0x18] sm:$0xf]
    %v270 = vld [vmem:[#allocation8 + $0x1c] sm:$0xf]
    %v271 = vld [vmem:[#allocation8 + $0x20] sm:$0xf]
    %v272 = vld [vmem:[#allocation8 + $0x24] sm:$0xf]
    %v273 = vld [vmem:[#allocation8 + $0x28] sm:$0xf]
    %v274 = vld [vmem:[#allocation8 + $0x2c] sm:$0xf]
    %v275 = vld [vmem:[#allocation8 + $0x30] sm:$0xf]
    %v276 = vld [vmem:[#allocation8 + $0x34] sm:$0xf]
    %v277 = vld [vmem:[#allocation8 + $0x38] sm:$0xf]
    %v278 = vld [vmem:[#allocation8 + $0x3c] sm:$0xf]
    %v279 = vld [vmem:[%s5 + $0x2] sm:$0x1]
    %v280 = vlaneseq
    %v281 = vshrl.u32 %v280, 7
    %v282 = vsub.s32 0, %v281
    %v283 = vrot.slane %v279, %v282
    %v300 = vunpack.c.l.b16 %v263
    %v301 = vunpack.c.l.b16 %v264
    %v302 = vunpack.c.l.b16 %v265
    %v303 = vunpack.c.l.b16 %v266
    %v304 = vunpack.c.l.b16 %v267
    %v305 = vunpack.c.l.b16 %v268
    %v306 = vunpack.c.l.b16 %v269
    %v307 = vunpack.c.l.b16 %v270
    %v308 = vunpack.c.l.b16 %v271
    %v309 = vunpack.c.l.b16 %v272
    %v310 = vunpack.c.l.b16 %v273
    %v311 = vunpack.c.l.b16 %v274
    %v312 = vunpack.c.l.b16 %v275
    %v313 = vunpack.c.l.b16 %v276
    %v314 = vunpack.c.l.b16 %v277
    %v315 = vunpack.c.l.b16 %v278
    %v316 = vpack.c.b16 %v301, %v300
    %v317 = vpack.c.b16 %v303, %v302
    %v318 = vpack.c.b16 %v305, %v304
    %v319 = vpack.c.b16 %v307, %v306
    %v320 = vpack.c.b16 %v309, %v308
    %v321 = vpack.c.b16 %v311, %v310
    %v322 = vpack.c.b16 %v313, %v312
    %v323 = vpack.c.b16 %v315, %v314
    %332 = vmatprep.subr.bf16.mxu0 0
    %333 = vmatpush1.bf16.msra.mxu0 %v316
    %334 = vmatprep.subr.bf16.mxu0 0
    %335 = vmatpush1.bf16.msra.mxu0 %v317
    %336 = vmatprep.subr.bf16.mxu0 0
    %337 = vmatpush1.bf16.msra.mxu0 %v318
    %338 = vmatprep.subr.bf16.mxu0 0
    %339 = vmatpush1.bf16.msra.mxu0 %v319
    %340 = vmatprep.subr.bf16.mxu0 0
    %341 = vmatpush1.bf16.msra.mxu0 %v320
    %342 = vmatprep.subr.bf16.mxu0 0
    %343 = vmatpush1.bf16.msra.mxu0 %v321
    %344 = vmatprep.subr.bf16.mxu0 0
    %345 = vmatpush1.bf16.msra.mxu0 %v322
    %346 = vmatprep.subr.bf16.mxu0 0
    %347 = vmatpush1.bf16.msra.mxu0 %v323
    %348 = vmatprep.subr.bf16.mxu0 0
    %349 = vmatpush1.bf16.msra.mxu0 0
    %350 = vmatprep.subr.bf16.mxu0 0
    %351 = vmatpush1.bf16.msra.mxu0 0
    %352 = vmatprep.subr.bf16.mxu0 0
    %353 = vmatpush1.bf16.msra.mxu0 0
    %354 = vmatprep.subr.bf16.mxu0 0
    %355 = vmatpush1.bf16.msra.mxu0 0
    %356 = vmatprep.subr.bf16.mxu0 0
    %357 = vmatpush1.bf16.msra.mxu0 0
    %358 = vmatprep.subr.bf16.mxu0 0
    %359 = vmatpush1.bf16.msra.mxu0 0
    %360 = vmatprep.subr.bf16.mxu0 0
    %361 = vmatpush1.bf16.msra.mxu0 0
    %362 = vmatprep.subr.bf16.mxu0 0
    %363 = vmatpush1.bf16.msra.mxu0 0
    %364 = vmatprep.mubr.bf16.mxu0 0
    %365 = vmatmul.mubr.bf16.gmra.mrb[0].mxu0 %v262
    %v366 = vpop.f32.mrb[0].mxu0
    %v367 = vadd.f32 %v283, %v366
    %v368 = vpop.f32.mrb[0].mxu0
    %v369 = vpop.f32.mrb[0].mxu0
    %v370 = vpop.f32.mrb[0].mxu0
    %371 = vdwg.mxu0
    %v372 = vadd.f32 %v367, 3.0
    %v373 = vmax.f32 %v372, 0.0
    %v374 = vmin.f32 %v373, 6.0
    %v375 = vmul.f32 %v367, %v374
    %v376 = vmul.f32 %v375, 0.16666667
    %v377 = vpack.c.bf16 %v376, %v376
    %v378 = vld [vmem:[#allocation10] sm:$0xf]
    %v379 = vld [vmem:[#allocation10 + $0x4] sm:$0xf]
    %v380 = vld [vmem:[#allocation10 + $0x8] sm:$0xf]
    %v381 = vld [vmem:[#allocation10 + $0xc] sm:$0xf]
    %v382 = vld [vmem:[#allocation10 + $0x10] sm:$0xf]
    %v383 = vld [vmem:[#allocation10 + $0x14] sm:$0xf]
    %v384 = vld [vmem:[#allocation10 + $0x18] sm:$0xf]
    %v385 = vld [vmem:[#allocation10 + $0x1c] sm:$0xf]
    %v386 = vld [vmem:[#allocation10 + $0x20] sm:$0xf]
    %v387 = vld [vmem:[#allocation10 + $0x24] sm:$0xf]
    %v388 = vld [vmem:[#allocation10 + $0x28] sm:$0xf]
    %v389 = vld [vmem:[#allocation10 + $0x2c] sm:$0xf]
    %v390 = vld [vmem:[#allocation10 + $0x30] sm:$0xf]
    %v391 = vld [vmem:[#allocation10 + $0x34] sm:$0xf]
    %v392 = vld [vmem:[#allocation10 + $0x38] sm:$0xf]
    %v393 = vld [vmem:[#allocation10 + $0x3c] sm:$0xf]
    %v410 = vunpack.c.l.b16 %v378
    %v411 = vunpack.c.l.b16 %v379
    %v412 = vunpack.c.l.b16 %v380
    %v413 = vunpack.c.l.b16 %v381
    %v414 = vunpack.c.l.b16 %v382
    %v415 = vunpack.c.l.b16 %v383
    %v416 = vunpack.c.l.b16 %v384
    %v417 = vunpack.c.l.b16 %v385
    %v418 = vunpack.c.l.b16 %v386
    %v419 = vunpack.c.l.b16 %v387
    %v420 = vunpack.c.l.b16 %v388
    %v421 = vunpack.c.l.b16 %v389
    %v422 = vunpack.c.l.b16 %v390
    %v423 = vunpack.c.l.b16 %v391
    %v424 = vunpack.c.l.b16 %v392
    %v425 = vunpack.c.l.b16 %v393
    %v426 = vpack.c.b16 %v411, %v410
    %v427 = vpack.c.b16 %v413, %v412
    %v428 = vpack.c.b16 %v415, %v414
    %v429 = vpack.c.b16 %v417, %v416
    %v430 = vpack.c.b16 %v419, %v418
    %v431 = vpack.c.b16 %v421, %v420
    %v432 = vpack.c.b16 %v423, %v422
    %v433 = vpack.c.b16 %v425, %v424
    %442 = vmatprep.subr.bf16.mxu0 0
    %443 = vmatpush1.bf16.msra.mxu0 %v426
    %444 = vmatprep.subr.bf16.mxu0 0
    %445 = vmatpush1.bf16.msra.mxu0 %v427
    %446 = vmatprep.subr.bf16.mxu0 0
    %447 = vmatpush1.bf16.msra.mxu0 %v428
    %448 = vmatprep.subr.bf16.mxu0 0
    %449 = vmatpush1.bf16.msra.mxu0 %v429
    %450 = vmatprep.subr.bf16.mxu0 0
    %451 = vmatpush1.bf16.msra.mxu0 %v430
    %452 = vmatprep.subr.bf16.mxu0 0
    %453 = vmatpush1.bf16.msra.mxu0 %v431
    %454 = vmatprep.subr.bf16.mxu0 0
    %455 = vmatpush1.bf16.msra.mxu0 %v432
    %456 = vmatprep.subr.bf16.mxu0 0
    %457 = vmatpush1.bf16.msra.mxu0 %v433
    %458 = vmatprep.subr.bf16.mxu0 0
    %459 = vmatpush1.bf16.msra.mxu0 0
    %460 = vmatprep.subr.bf16.mxu0 0
    %461 = vmatpush1.bf16.msra.mxu0 0
    %462 = vmatprep.subr.bf16.mxu0 0
    %463 = vmatpush1.bf16.msra.mxu0 0
    %464 = vmatprep.subr.bf16.mxu0 0
    %465 = vmatpush1.bf16.msra.mxu0 0
    %466 = vmatprep.subr.bf16.mxu0 0
    %467 = vmatpush1.bf16.msra.mxu0 0
    %468 = vmatprep.subr.bf16.mxu0 0
    %469 = vmatpush1.bf16.msra.mxu0 0
    %470 = vmatprep.subr.bf16.mxu0 0
    %471 = vmatpush1.bf16.msra.mxu0 0
    %472 = vmatprep.subr.bf16.mxu0 0
    %473 = vmatpush1.bf16.msra.mxu0 0
    %474 = vmatprep.mubr.bf16.mxu0 0
    %475 = vmatmul.mubr.bf16.gmra.mrb[0].mxu0 %v377
    %v476 = vpop.f32.mrb[0].mxu0
    %v477 = vadd.f32 0.0, %v476
    %v478 = vpop.f32.mrb[0].mxu0
    %v479 = vpop.f32.mrb[0].mxu0
    %v480 = vpop.f32.mrb[0].mxu0
    %481 = vdwg.mxu0
    %v482 = vld [vmem:[%s5 + $0x3] sm:$0x1]
    %v483 = vlaneseq
    %v484 = vshrl.u32 %v483, 7
    %v485 = vsub.s32 0, %v484
    %v486 = vrot.slane %v482, %v485
    %v487 = vadd.f32 %v477, %v486
    %vm488 = vcmask 64512
    %489 = vst.msk [vmem:[#allocation11] sm:$0xff] %vm488, %v487
    // Predicated region
    $region46: #{tpu_custom_call.1} parent=1 // pred_check
      _
    $region47: #{tpu_custom_call.1} parent=1 // pred_check_branch
      %491 = sbr.rel (0) target = $region49
    $region48: #{tpu_custom_call.1} parent=1 // pred_region
      %s493 = ssub.s32 128, 128
      %494 = vsyncadd [#allocation4], %s493
      %s496 = sshll.u32 [#allocation11], 4
      %s497 = int_to_ptr.vmem [resolvable:$true] %s496
      %499 = dma.vmem_to_hbm [thread:$0]  %s497, 128, %s6, [#allocation4]
    $region49: #{tpu_custom_call.1} parent=1 // pred_fallthru
      _
    // Predicated region
    $region50: #{tpu_custom_call.1} parent=1 // pred_check
      _
    $region51: #{tpu_custom_call.1} parent=1 // pred_check_branch
      %501 = sbr.rel (0) target = $region53
    $region52: #{tpu_custom_call.1} parent=1 // pred_region
      %502 = dma.done [#allocation4], 128
    $region53: #{tpu_custom_call.1} parent=1 // pred_fallthru
      _
    %503 = vsyncpa [#allocation3], 1
    %504 = vsyncpa [#allocation6], 1
    %505 = vsyncpa [#allocation9], 1
    %506 = vsyncpa [#allocation4], 1

</llo_original>
